<compile_context>
chip_gen: v6e
topology: v6e:2x2x1
jax: 0.10.0
libtpu: 0.0.40
codegen_flags: <defaults>
</compile_context>

<pallas_src>
import functools

import jax
import jax.numpy as jnp
from jax.experimental import pallas as pl
from jax.experimental.pallas import tpu as pltpu


def _round_up(x, m):
    return (x + m - 1) // m * m


# --------------------------- phase A kernel ----------------------------------
def stats_matmul_kernel(x_ref, w1_ref, h_ref, sum_ref, sq_ref):
    """h_tile = x_tile @ W1 ; accumulate per-feature sum / sum-of-squares."""
    i = pl.program_id(0)

    # MXU matmul in the input's native dtype, f32 accumulation.
    h = jnp.dot(x_ref[...], w1_ref[...], preferred_element_type=jnp.float32)
    h_ref[...] = h.astype(h_ref.dtype)

    @pl.when(i == 0)
    def _():
        sum_ref[...] = jnp.zeros_like(sum_ref)
        sq_ref[...] = jnp.zeros_like(sq_ref)

    # Accumulators are VMEM-resident across the whole ("arbitrary") batch axis.
    sum_ref[...] = sum_ref[...] + jnp.sum(h, axis=0, keepdims=True)
    sq_ref[...] = sq_ref[...] + jnp.sum(h * h, axis=0, keepdims=True)


# --------------------------- phase B kernel ----------------------------------
def bn_relu_matmul_kernel(h_ref, sum_ref, sq_ref, gamma_ref, beta_ref,
                          w2_ref, b2_ref, o_ref, *, inv_batch):
    """Normalize with full-batch stats, ReLU, then h_tile @ W2 + b2."""
    mean = sum_ref[...] * inv_batch                              # (1, hidden)
    var = jnp.maximum(sq_ref[...] * inv_batch - mean * mean, 0.0)
    inv_std = jax.lax.rsqrt(var + 1e-5)
    scale = gamma_ref[...] * inv_std                             # fold gamma
    shift = beta_ref[...] - mean * scale                         # fold beta

    h = h_ref[...].astype(jnp.float32) * scale + shift           # BN (f32)
    h = jnp.maximum(h, 0.0)                                      # ReLU

    y = jnp.dot(h.astype(w2_ref.dtype), w2_ref[...],
                preferred_element_type=jnp.float32)
    o_ref[...] = (y + b2_ref[...]).astype(o_ref.dtype)


# ------------------------------- wrapper --------------------------------------
@functools.partial(jax.jit, static_argnames=("tile_b",))
def projection_head(x, w1_t, b1, gamma, beta, w2_t, b2, *, tile_b=256):
    """x: [B, in_dim]; w1_t: [in_dim, hidden]; w2_t: [hidden, out_dim]."""
    del b1  # bias before training-mode BatchNorm cancels exactly.

    B, in_dim = x.shape
    hidden = w1_t.shape[1]
    out_dim = w2_t.shape[1]

    # Lane-dense feature dims (multiples of 128), batch padded to tile size.
    in_dim_p = _round_up(in_dim, 128)
    hidden_p = _round_up(hidden, 128)
    out_dim_p = _round_up(out_dim, 128)
    tile_b = min(tile_b, _round_up(B, 8))
    B_pad = _round_up(B, tile_b)
    grid_b = B_pad // tile_b

    # Zero-padding is exact: padded x rows / W cols contribute nothing to the
    # matmuls or the sum/sumsq accumulators (divisor is the real B).
    x_p = jnp.zeros((B_pad, in_dim_p), x.dtype).at[:B, :in_dim].set(x)
    w1_p = jnp.zeros((in_dim_p, hidden_p), w1_t.dtype).at[:in_dim, :hidden].set(w1_t)
    gamma_p = jnp.zeros((1, hidden_p), jnp.float32).at[0, :hidden].set(
        gamma.astype(jnp.float32))
    beta_p = jnp.zeros((1, hidden_p), jnp.float32).at[0, :hidden].set(
        beta.astype(jnp.float32))
    w2_p = jnp.zeros((hidden_p, out_dim_p), w2_t.dtype).at[:hidden, :out_dim].set(w2_t)
    b2_p = jnp.zeros((1, out_dim_p), jnp.float32).at[0, :out_dim].set(
        b2.astype(jnp.float32))

    x_isz = jnp.dtype(x.dtype).itemsize
    w_isz = jnp.dtype(w1_t.dtype).itemsize

    def _vmem_limit(est_bytes):
        # 2x headroom, at least the 32 MiB scoped budget, capped at 64 MiB
        # (v7x physical per-TC VMEM).
        return int(min(64 * 2**20, max(32 * 2**20, 2 * est_bytes)))

    # ----- phase A: matmul1 + batch statistics ("arbitrary" -> accumulator) --
    est1 = (2 * tile_b * (in_dim_p + hidden_p) * x_isz      # double-buffered tiles
            + in_dim_p * hidden_p * w_isz                   # resident W1
            + 4 * hidden_p * 4)                             # accumulators
    h, ssum, ssq = pl.pallas_call(
        stats_matmul_kernel,
        grid=(grid_b,),
        in_specs=[
            pl.BlockSpec((tile_b, in_dim_p), lambda i: (i, 0)),    # x tile
            pl.BlockSpec((in_dim_p, hidden_p), lambda i: (0, 0)),  # W1 resident
        ],
        out_specs=[
            pl.BlockSpec((tile_b, hidden_p), lambda i: (i, 0)),    # h tile
            pl.BlockSpec((1, hidden_p), lambda i: (0, 0)),         # sum (resident)
            pl.BlockSpec((1, hidden_p), lambda i: (0, 0)),         # sumsq (resident)
        ],
        out_shape=[
            jax.ShapeDtypeStruct((B_pad, hidden_p), x.dtype),
            jax.ShapeDtypeStruct((1, hidden_p), jnp.float32),
            jax.ShapeDtypeStruct((1, hidden_p), jnp.float32),
        ],
        compiler_params=pltpu.CompilerParams(
            dimension_semantics=("arbitrary",),
            vmem_limit_bytes=_vmem_limit(est1)),
    )(x_p, w1_p)

    # ----- phase B: BN + ReLU + matmul2 ("parallel" -> megacore on v7x) ------
    est2 = (2 * tile_b * (hidden_p + out_dim_p) * x_isz     # double-buffered tiles
            + hidden_p * out_dim_p * w_isz                  # resident W2
            + 6 * hidden_p * 4 + 2 * out_dim_p * 4)         # stats / params
    y_p = pl.pallas_call(
        functools.partial(bn_relu_matmul_kernel, inv_batch=1.0 / B),
        grid=(grid_b,),
        in_specs=[
            pl.BlockSpec((tile_b, hidden_p), lambda i: (i, 0)),    # h tile
            pl.BlockSpec((1, hidden_p), lambda i: (0, 0)),         # sum
            pl.BlockSpec((1, hidden_p), lambda i: (0, 0)),         # sumsq
            pl.BlockSpec((1, hidden_p), lambda i: (0, 0)),         # gamma
            pl.BlockSpec((1, hidden_p), lambda i: (0, 0)),         # beta
            pl.BlockSpec((hidden_p, out_dim_p), lambda i: (0, 0)), # W2 resident
            pl.BlockSpec((1, out_dim_p), lambda i: (0, 0)),        # b2
        ],
        out_specs=pl.BlockSpec((tile_b, out_dim_p), lambda i: (i, 0)),
        out_shape=jax.ShapeDtypeStruct((B_pad, out_dim_p), x.dtype),
        compiler_params=pltpu.CompilerParams(
            dimension_semantics=("parallel",),
            vmem_limit_bytes=_vmem_limit(est2)),
    )(h, ssum, ssq, gamma_p, beta_p, w2_p, b2_p)

    return y_p[:B, :out_dim]


# ------------------------------ reference --------------------------------------
def reference(x, w1_t, b1, gamma, beta, w2_t, b2):
    h = x @ w1_t + b1
    mean = h.mean(axis=0, keepdims=True)
    var = ((h - mean) ** 2).mean(axis=0, keepdims=True)   # biased, training mode
    h = (h - mean) / jnp.sqrt(var + 1e-5)
    h = h * gamma + beta
    h = jnp.maximum(h, 0.0)
    return h @ w2_t + b2


if __name__ == "__main__":
    # Small shapes consistent with the module (in_dim -> hidden -> out_dim).
    # B=20 with tile_b=8 exercises multi-tile stats accumulation and batch /
    # feature padding (hidden=32, out_dim=16 pad up to 128 lanes).
    B, in_dim, hidden, out_dim = 20, 64, 32, 16

    key = jax.random.PRNGKey(0)
    kx, kw1, kb1, kg, kbt, kw2, kb2 = jax.random.split(key, 7)

    x = jax.random.normal(kx, (B, in_dim), dtype=jnp.float32)

    # Deterministic synthetic parameters (PyTorch Linear-like scale).
    w1_t = jax.random.uniform(kw1, (in_dim, hidden), jnp.float32,
                              minval=-1.0, maxval=1.0) / jnp.sqrt(in_dim)
    b1 = jax.random.uniform(kb1, (hidden,), jnp.float32,
                            minval=-1.0, maxval=1.0) / jnp.sqrt(in_dim)
    gamma = 1.0 + 0.1 * jax.random.normal(kg, (hidden,), dtype=jnp.float32)
    beta = 0.1 * jax.random.normal(kbt, (hidden,), dtype=jnp.float32)
    w2_t = jax.random.uniform(kw2, (hidden, out_dim), jnp.float32,
                              minval=-1.0, maxval=1.0) / jnp.sqrt(hidden)
    b2 = jax.random.uniform(kb2, (out_dim,), jnp.float32,
                            minval=-1.0, maxval=1.0) / jnp.sqrt(hidden)

    out = projection_head(x, w1_t, b1, gamma, beta, w2_t, b2, tile_b=8)
    out = jax.block_until_ready(out)

    ref = reference(x, w1_t, b1, gamma, beta, w2_t, b2)
    assert out.shape == (B, out_dim)
    assert jnp.allclose(out, ref, atol=1e-3, rtol=1e-3), "mismatch vs JAX reference"

    print("KERNEL_OK")
</pallas_src>

<mosaic_0001>
module attributes {stable_mosaic.version = 11 : i64} {
  func.func @stats_matmul_kernel(%arg0: i32, %arg1: memref<8x128xf32, #tpu.memory_space<vmem>>, %arg2: memref<128x128xf32, #tpu.memory_space<vmem>>, %arg3: memref<8x128xf32, #tpu.memory_space<vmem>>, %arg4: memref<1x128xf32, #tpu.memory_space<vmem>>, %arg5: memref<1x128xf32, #tpu.memory_space<vmem>>) attributes {dimension_semantics = [#tpu.dimension_semantics<arbitrary>], iteration_bounds = array<i64: 3>, scalar_prefetch = 0 : i64, scratch_operands = 0 : i64, tpu.core_type = #tpu.core_type<tc>, window_params = [{transform_indices = @transform_0, window_bounds = array<i64: 8, 128>}, {pipeline_mode = #tpu.pipeline_mode<synchronous>, transform_indices = @transform_1, window_bounds = array<i64: 128, 128>}, {transform_indices = @transform_2, window_bounds = array<i64: 8, 128>}, {pipeline_mode = #tpu.pipeline_mode<synchronous>, transform_indices = @transform_3, window_bounds = array<i64: 1, 128>}, {pipeline_mode = #tpu.pipeline_mode<synchronous>, transform_indices = @transform_4, window_bounds = array<i64: 1, 128>}]} {
    %c0 = arith.constant 0 : index
    %c0_0 = arith.constant 0 : index
    %0 = vector.load %arg1[%c0, %c0_0] : memref<8x128xf32, #tpu.memory_space<vmem>>, vector<8x128xf32>
    %c0_1 = arith.constant 0 : index
    %c0_2 = arith.constant 0 : index
    %1 = vector.load %arg2[%c0_1, %c0_2] : memref<128x128xf32, #tpu.memory_space<vmem>>, vector<128x128xf32>
    %cst = arith.constant dense<0.000000e+00> : vector<8x128xf32>
    %2 = tpu.matmul %0, %1, %cst {dimension_numbers = #tpu.dot_dimension_numbers<[1], [0], [0], [1], [0, 0, 1, 1], [], []>} : vector<8x128xf32>, vector<128x128xf32>, vector<8x128xf32> -> vector<8x128xf32>
    %c0_3 = arith.constant 0 : index
    %c0_4 = arith.constant 0 : index
    %3 = vector.load %arg3[%c0_3, %c0_4] : memref<8x128xf32, #tpu.memory_space<vmem>>, vector<8x128xf32>
    tpu.vector_store %arg3[%c0_3, %c0_4], %2 {strides = array<i32>} : memref<8x128xf32, #tpu.memory_space<vmem>>, vector<8x128xf32>,
    %c0_i32 = arith.constant 0 : i32
    %4 = arith.cmpi eq, %arg0, %c0_i32 : i32
    %5 = arith.extui %4 : i1 to i32
    %c0_i32_5 = arith.constant 0 : i32
    %6 = arith.cmpi ne, %5, %c0_i32_5 : i32
    scf.if %6 {
      %cst_16 = arith.constant 0.000000e+00 : f32
      %18 = vector.broadcast %cst_16 : f32 to vector<1x128xf32>
      %c0_17 = arith.constant 0 : index
      %c0_18 = arith.constant 0 : index
      %19 = vector.load %arg4[%c0_17, %c0_18] : memref<1x128xf32, #tpu.memory_space<vmem>>, vector<1x128xf32>
      tpu.vector_store %arg4[%c0_17, %c0_18], %18 {strides = array<i32>} : memref<1x128xf32, #tpu.memory_space<vmem>>, vector<1x128xf32>,
      %cst_19 = arith.constant 0.000000e+00 : f32
      %20 = vector.broadcast %cst_19 : f32 to vector<1x128xf32>
      %c0_20 = arith.constant 0 : index
      %c0_21 = arith.constant 0 : index
      %21 = vector.load %arg5[%c0_20, %c0_21] : memref<1x128xf32, #tpu.memory_space<vmem>>, vector<1x128xf32>
      tpu.vector_store %arg5[%c0_20, %c0_21], %20 {strides = array<i32>} : memref<1x128xf32, #tpu.memory_space<vmem>>, vector<1x128xf32>,
    } else {
    }
    %c0_6 = arith.constant 0 : index
    %c0_7 = arith.constant 0 : index
    %7 = vector.load %arg4[%c0_6, %c0_7] : memref<1x128xf32, #tpu.memory_space<vmem>>, vector<1x128xf32>
    %cst_8 = arith.constant dense<0.000000e+00> : vector<128xf32>
    %8 = vector.multi_reduction <add>, %2, %cst_8 [0] : vector<8x128xf32> to vector<128xf32>
    %9 = vector.shape_cast %8 : vector<128xf32> to vector<1x128xf32>
    %10 = arith.addf %7, %9 : vector<1x128xf32>
    %c0_9 = arith.constant 0 : index
    %c0_10 = arith.constant 0 : index
    %11 = vector.load %arg4[%c0_9, %c0_10] : memref<1x128xf32, #tpu.memory_space<vmem>>, vector<1x128xf32>
    tpu.vector_store %arg4[%c0_9, %c0_10], %10 {strides = array<i32>} : memref<1x128xf32, #tpu.memory_space<vmem>>, vector<1x128xf32>,
    %c0_11 = arith.constant 0 : index
    %c0_12 = arith.constant 0 : index
    %12 = vector.load %arg5[%c0_11, %c0_12] : memref<1x128xf32, #tpu.memory_space<vmem>>, vector<1x128xf32>
    %13 = arith.mulf %2, %2 : vector<8x128xf32>
    %cst_13 = arith.constant dense<0.000000e+00> : vector<128xf32>
    %14 = vector.multi_reduction <add>, %13, %cst_13 [0] : vector<8x128xf32> to vector<128xf32>
    %15 = vector.shape_cast %14 : vector<128xf32> to vector<1x128xf32>
    %16 = arith.addf %12, %15 : vector<1x128xf32>
    %c0_14 = arith.constant 0 : index
    %c0_15 = arith.constant 0 : index
    %17 = vector.load %arg5[%c0_14, %c0_15] : memref<1x128xf32, #tpu.memory_space<vmem>>, vector<1x128xf32>
    tpu.vector_store %arg5[%c0_14, %c0_15], %16 {strides = array<i32>} : memref<1x128xf32, #tpu.memory_space<vmem>>, vector<1x128xf32>,
    return
  }
  func.func @transform_0(%arg0: i32) -> (i32, i32) {
    %c0_i32 = arith.constant 0 : i32
    %c0_i32_0 = arith.constant 0 : i32
    return %arg0, %c0_i32 : i32, i32
  }
  func.func @transform_1(%arg0: i32) -> (i32, i32) {
    %c0_i32 = arith.constant 0 : i32
    %c0_i32_0 = arith.constant 0 : i32
    %c0_i32_1 = arith.constant 0 : i32
    return %c0_i32, %c0_i32_0 : i32, i32
  }
  func.func @transform_2(%arg0: i32) -> (i32, i32) {
    %c0_i32 = arith.constant 0 : i32
    %c0_i32_0 = arith.constant 0 : i32
    return %arg0, %c0_i32 : i32, i32
  }
  func.func @transform_3(%arg0: i32) -> (i32, i32) {
    %c0_i32 = arith.constant 0 : i32
    %c0_i32_0 = arith.constant 0 : i32
    %c0_i32_1 = arith.constant 0 : i32
    return %c0_i32, %c0_i32_0 : i32, i32
  }
  func.func @transform_4(%arg0: i32) -> (i32, i32) {
    %c0_i32 = arith.constant 0 : i32
    %c0_i32_0 = arith.constant 0 : i32
    %c0_i32_1 = arith.constant 0 : i32
    return %c0_i32, %c0_i32_0 : i32, i32
  }
}

module attributes {stable_mosaic.version = 11 : i64} {
  func.func @bn_relu_matmul_kernel(%arg0: i32, %arg1: memref<8x128xf32, #tpu.memory_space<vmem>>, %arg2: memref<1x128xf32, #tpu.memory_space<vmem>>, %arg3: memref<1x128xf32, #tpu.memory_space<vmem>>, %arg4: memref<1x128xf32, #tpu.memory_space<vmem>>, %arg5: memref<1x128xf32, #tpu.memory_space<vmem>>, %arg6: memref<128x128xf32, #tpu.memory_space<vmem>>, %arg7: memref<1x128xf32, #tpu.memory_space<vmem>>, %arg8: memref<8x128xf32, #tpu.memory_space<vmem>>) attributes {dimension_semantics = [#tpu.dimension_semantics<parallel>], iteration_bounds = array<i64: 3>, scalar_prefetch = 0 : i64, scratch_operands = 0 : i64, tpu.core_type = #tpu.core_type<tc>, window_params = [{transform_indices = @transform_0, window_bounds = array<i64: 8, 128>}, {pipeline_mode = #tpu.pipeline_mode<synchronous>, transform_indices = @transform_1, window_bounds = array<i64: 1, 128>}, {pipeline_mode = #tpu.pipeline_mode<synchronous>, transform_indices = @transform_2, window_bounds = array<i64: 1, 128>}, {pipeline_mode = #tpu.pipeline_mode<synchronous>, transform_indices = @transform_3, window_bounds = array<i64: 1, 128>}, {pipeline_mode = #tpu.pipeline_mode<synchronous>, transform_indices = @transform_4, window_bounds = array<i64: 1, 128>}, {pipeline_mode = #tpu.pipeline_mode<synchronous>, transform_indices = @transform_5, window_bounds = array<i64: 128, 128>}, {pipeline_mode = #tpu.pipeline_mode<synchronous>, transform_indices = @transform_6, window_bounds = array<i64: 1, 128>}, {transform_indices = @transform_7, window_bounds = array<i64: 8, 128>}]} {
    %c0 = arith.constant 0 : index
    %c0_0 = arith.constant 0 : index
    %0 = vector.load %arg2[%c0, %c0_0] : memref<1x128xf32, #tpu.memory_space<vmem>>, vector<1x128xf32>
    %cst = arith.constant 5.000000e-02 : f32
    %1 = vector.broadcast %cst : f32 to vector<1x128xf32>
    %2 = arith.mulf %0, %1 : vector<1x128xf32>
    %c0_1 = arith.constant 0 : index
    %c0_2 = arith.constant 0 : index
    %3 = vector.load %arg3[%c0_1, %c0_2] : memref<1x128xf32, #tpu.memory_space<vmem>>, vector<1x128xf32>
    %cst_3 = arith.constant 5.000000e-02 : f32
    %4 = vector.broadcast %cst_3 : f32 to vector<1x128xf32>
    %5 = arith.mulf %3, %4 : vector<1x128xf32>
    %6 = arith.mulf %2, %2 : vector<1x128xf32>
    %7 = arith.subf %5, %6 : vector<1x128xf32>
    %cst_4 = arith.constant 0.000000e+00 : f32
    %8 = vector.broadcast %cst_4 : f32 to vector<1x128xf32>
    %9 = arith.maximumf %7, %8 : vector<1x128xf32>
    %cst_5 = arith.constant 9.99999974E-6 : f32
    %10 = vector.broadcast %cst_5 : f32 to vector<1x128xf32>
    %11 = arith.addf %9, %10 : vector<1x128xf32>
    %12 = math.rsqrt %11 : vector<1x128xf32>
    %c0_6 = arith.constant 0 : index
    %c0_7 = arith.constant 0 : index
    %13 = vector.load %arg4[%c0_6, %c0_7] : memref<1x128xf32, #tpu.memory_space<vmem>>, vector<1x128xf32>
    %14 = arith.mulf %13, %12 : vector<1x128xf32>
    %c0_8 = arith.constant 0 : index
    %c0_9 = arith.constant 0 : index
    %15 = vector.load %arg5[%c0_8, %c0_9] : memref<1x128xf32, #tpu.memory_space<vmem>>, vector<1x128xf32>
    %16 = arith.mulf %2, %14 : vector<1x128xf32>
    %17 = arith.subf %15, %16 : vector<1x128xf32>
    %c0_10 = arith.constant 0 : index
    %c0_11 = arith.constant 0 : index
    %18 = vector.load %arg1[%c0_10, %c0_11] : memref<8x128xf32, #tpu.memory_space<vmem>>, vector<8x128xf32>
    %19 = vector.broadcast %14 : vector<1x128xf32> to vector<8x128xf32>
    %20 = arith.mulf %18, %19 : vector<8x128xf32>
    %21 = vector.broadcast %17 : vector<1x128xf32> to vector<8x128xf32>
    %22 = arith.addf %20, %21 : vector<8x128xf32>
    %cst_12 = arith.constant 0.000000e+00 : f32
    %23 = vector.broadcast %cst_12 : f32 to vector<8x128xf32>
    %24 = arith.maximumf %22, %23 : vector<8x128xf32>
    %c0_13 = arith.constant 0 : index
    %c0_14 = arith.constant 0 : index
    %25 = vector.load %arg6[%c0_13, %c0_14] : memref<128x128xf32, #tpu.memory_space<vmem>>, vector<128x128xf32>
    %cst_15 = arith.constant dense<0.000000e+00> : vector<8x128xf32>
    %26 = tpu.matmul %24, %25, %cst_15 {dimension_numbers = #tpu.dot_dimension_numbers<[1], [0], [0], [1], [0, 0, 1, 1], [], []>} : vector<8x128xf32>, vector<128x128xf32>, vector<8x128xf32> -> vector<8x128xf32>
    %c0_16 = arith.constant 0 : index
    %c0_17 = arith.constant 0 : index
    %27 = vector.load %arg7[%c0_16, %c0_17] : memref<1x128xf32, #tpu.memory_space<vmem>>, vector<1x128xf32>
    %28 = vector.broadcast %27 : vector<1x128xf32> to vector<8x128xf32>
    %29 = arith.addf %26, %28 : vector<8x128xf32>
    %c0_18 = arith.constant 0 : index
    %c0_19 = arith.constant 0 : index
    %30 = vector.load %arg8[%c0_18, %c0_19] : memref<8x128xf32, #tpu.memory_space<vmem>>, vector<8x128xf32>
    tpu.vector_store %arg8[%c0_18, %c0_19], %29 {strides = array<i32>} : memref<8x128xf32, #tpu.memory_space<vmem>>, vector<8x128xf32>,
    return
  }
  func.func @transform_0(%arg0: i32) -> (i32, i32) {
    %c0_i32 = arith.constant 0 : i32
    %c0_i32_0 = arith.constant 0 : i32
    return %arg0, %c0_i32 : i32, i32
  }
  func.func @transform_1(%arg0: i32) -> (i32, i32) {
    %c0_i32 = arith.constant 0 : i32
    %c0_i32_0 = arith.constant 0 : i32
    %c0_i32_1 = arith.constant 0 : i32
    return %c0_i32, %c0_i32_0 : i32, i32
  }
  func.func @transform_2(%arg0: i32) -> (i32, i32) {
    %c0_i32 = arith.constant 0 : i32
    %c0_i32_0 = arith.constant 0 : i32
    %c0_i32_1 = arith.constant 0 : i32
    return %c0_i32, %c0_i32_0 : i32, i32
  }
  func.func @transform_3(%arg0: i32) -> (i32, i32) {
    %c0_i32 = arith.constant 0 : i32
    %c0_i32_0 = arith.constant 0 : i32
    %c0_i32_1 = arith.constant 0 : i32
    return %c0_i32, %c0_i32_0 : i32, i32
  }
  func.func @transform_4(%arg0: i32) -> (i32, i32) {
    %c0_i32 = arith.constant 0 : i32
    %c0_i32_0 = arith.constant 0 : i32
    %c0_i32_1 = arith.constant 0 : i32
    return %c0_i32, %c0_i32_0 : i32, i32
  }
  func.func @transform_5(%arg0: i32) -> (i32, i32) {
    %c0_i32 = arith.constant 0 : i32
    %c0_i32_0 = arith.constant 0 : i32
    %c0_i32_1 = arith.constant 0 : i32
    return %c0_i32, %c0_i32_0 : i32, i32
  }
  func.func @transform_6(%arg0: i32) -> (i32, i32) {
    %c0_i32 = arith.constant 0 : i32
    %c0_i32_0 = arith.constant 0 : i32
    %c0_i32_1 = arith.constant 0 : i32
    return %c0_i32, %c0_i32_0 : i32, i32
  }
  func.func @transform_7(%arg0: i32) -> (i32, i32) {
    %c0_i32 = arith.constant 0 : i32
    %c0_i32_0 = arith.constant 0 : i32
    return %arg0, %c0_i32 : i32, i32
  }
}

</mosaic_0001>

<llo_original>
// kernel: projection_head.2
$region0: #{projection_head.2}
  #allocation0 [shape = 'u32[]', space=smem, size = 0x4, offset = 0x4, fixed_abs, tag = 'smem constant byte address 0x4 - core index']
  #allocation1 [shape = 'u32[144,128]{1,0:T(1,128)}', space=vmem, size = 0x12000, scoped, tag = 'internal scratch']
  %s0 = inlined_call_operand.vmem [shape: f32[24,128], index: 0, kind: input, shape index: {}]
  %s1 = inlined_call_operand.vmem [shape: f32[128,128], index: 1, kind: input, shape index: {}]
  %s2 = inlined_call_operand.vmem [shape: f32[24,128], index: 2, kind: output, shape index: {0}]
  %s3 = inlined_call_operand.vmem [shape: f32[1,128], index: 3, kind: output, shape index: {1}]
  %s4 = inlined_call_operand.vmem [shape: f32[1,128], index: 4, kind: output, shape index: {2}]
  %5 = xla_tuple %s2, %s3, %s4
  %s6 = sld [smem:[#allocation0]]
  $region61: #{projection_head.2} parent=0
    _
  %s8 = ssub.s32 1, %s6
  %s9 = scalar_select 0, %s8, %s6
  loop: start=0, step=1, limit=5
  $region2: #{projection_head.2} parent=0 // loop_pre_header
    _
  $region3: #{projection_head.2} parent=0 // loop_header
    %s11 = sphi 0, %s15
    %p12 = scmp.ge.s32.totalorder %s11, 5
    %s21 = sphi 0, %s23
    %s24 = sphi 0, %s21
    %s25 = sphi 0, %s24
    %s41 = sphi 0, %s25
    %s45 = sphi 0, %s45
    %s47 = sphi 0, %s45
    %s48 = sphi 0, %s47
    %s62 = sphi 0, %s48
    %s68 = sphi 0, %s70
    %s71 = sphi 0, %s68
    %s72 = sphi 0, %s71
    %s88 = sphi 0, %s72
    %s92 = sphi 0, %s92
    %s94 = sphi 0, %s92
    %s95 = sphi 0, %s94
    %s109 = sphi 0, %s95
    %s113 = sphi 0, %s113
    %s115 = sphi 0, %s113
    %s116 = sphi 0, %s115
    %s130 = sphi 0, %s116
  $region4: #{projection_head.2} parent=0 // loop_header_branch
    %14 = sbr.rel (%p12) target = $region8
  $region5: #{projection_head.2} parent=0 // loop_body
    %s16 = ssub.s32 %s11, 1
    %s17 = ssub.s32 %s11, 2
    %s18 = sadd.s32 %s11, 1
    %s19 = ssub.s32 %s11, %s18
    %p20 = scmp.eq.s32.totalorder %s19, 0
    %s22 = sadd.s32 %s21, 1
    %s23 = scalar_select %p20, %s21, %s22
    %p26 = pneg %p20
    %p27 = scmp.eq.s32.totalorder %s11, 2
    %p28 = por %p26, %p27
    %p29 = scmp.ne.s32.totalorder %s21, %s24
    %p30 = scmp.eq.s32.totalorder %s11, 0
    %p31 = por %p29, %p30
    %p32 = scmp.ne.s32.totalorder %s21, %s24
    %p33 = scmp.eq.s32.totalorder %s16, 2
    %p34 = por %p32, %p33
    %p35 = scmp.ne.s32.totalorder %s24, %s25
    %p36 = scmp.eq.s32.totalorder %s16, 0
    %p37 = por %p35, %p36
    %p38 = scmp.ne.s32.totalorder %s24, %s25
    %p39 = scmp.eq.s32.totalorder %s17, 2
    %p40 = por %p38, %p39
    %p42 = scmp.ne.s32.totalorder %s25, %s41
    %p43 = scmp.eq.s32.totalorder %s17, 0
    %p44 = por %p42, %p43
    %s46 = sadd.s32 %s45, 1
    %p49 = scmp.eq.s32.totalorder %s11, 2
    %p50 = scmp.ne.s32.totalorder %s45, %s47
    %p51 = scmp.eq.s32.totalorder %s11, 0
    %p52 = por %p50, %p51
    %p53 = scmp.ne.s32.totalorder %s45, %s47
    %p54 = scmp.eq.s32.totalorder %s16, 2
    %p55 = por %p53, %p54
    %p56 = scmp.ne.s32.totalorder %s47, %s48
    %p57 = scmp.eq.s32.totalorder %s16, 0
    %p58 = por %p56, %p57
    %p59 = scmp.ne.s32.totalorder %s47, %s48
    %p60 = scmp.eq.s32.totalorder %s17, 2
    %p61 = por %p59, %p60
    %p63 = scmp.ne.s32.totalorder %s48, %s62
    %p64 = scmp.eq.s32.totalorder %s17, 0
    %p65 = por %p63, %p64
    %s66 = ssub.s32 %s11, %s18
    %p67 = scmp.eq.s32.totalorder %s66, 0
    %s69 = sadd.s32 %s68, 1
    %s70 = scalar_select %p67, %s68, %s69
    %p73 = pneg %p67
    %p74 = scmp.eq.s32.totalorder %s11, 2
    %p75 = por %p73, %p74
    %p76 = scmp.ne.s32.totalorder %s68, %s71
    %p77 = scmp.eq.s32.totalorder %s11, 0
    %p78 = por %p76, %p77
    %p79 = scmp.ne.s32.totalorder %s68, %s71
    %p80 = scmp.eq.s32.totalorder %s16, 2
    %p81 = por %p79, %p80
    %p82 = scmp.ne.s32.totalorder %s71, %s72
    %p83 = scmp.eq.s32.totalorder %s16, 0
    %p84 = por %p82, %p83
    %p85 = scmp.ne.s32.totalorder %s71, %s72
    %p86 = scmp.eq.s32.totalorder %s17, 2
    %p87 = por %p85, %p86
    %p89 = scmp.ne.s32.totalorder %s72, %s88
    %p90 = scmp.eq.s32.totalorder %s17, 0
    %p91 = por %p89, %p90
    %s93 = sadd.s32 %s92, 1
    %p96 = scmp.eq.s32.totalorder %s11, 2
    %p97 = scmp.ne.s32.totalorder %s92, %s94
    %p98 = scmp.eq.s32.totalorder %s11, 0
    %p99 = por %p97, %p98
    %p100 = scmp.ne.s32.totalorder %s92, %s94
    %p101 = scmp.eq.s32.totalorder %s16, 2
    %p102 = por %p100, %p101
    %p103 = scmp.ne.s32.totalorder %s94, %s95
    %p104 = scmp.eq.s32.totalorder %s16, 0
    %p105 = por %p103, %p104
    %p106 = scmp.ne.s32.totalorder %s94, %s95
    %p107 = scmp.eq.s32.totalorder %s17, 2
    %p108 = por %p106, %p107
    %p110 = scmp.ne.s32.totalorder %s95, %s109
    %p111 = scmp.eq.s32.totalorder %s17, 0
    %p112 = por %p110, %p111
    %s114 = sadd.s32 %s113, 1
    %p117 = scmp.eq.s32.totalorder %s11, 2
    %p118 = scmp.ne.s32.totalorder %s113, %s115
    %p119 = scmp.eq.s32.totalorder %s11, 0
    %p120 = por %p118, %p119
    %p121 = scmp.ne.s32.totalorder %s113, %s115
    %p122 = scmp.eq.s32.totalorder %s16, 2
    %p123 = por %p121, %p122
    %p124 = scmp.ne.s32.totalorder %s115, %s116
    %p125 = scmp.eq.s32.totalorder %s16, 0
    %p126 = por %p124, %p125
    %p127 = scmp.ne.s32.totalorder %s115, %s116
    %p128 = scmp.eq.s32.totalorder %s17, 2
    %p129 = por %p127, %p128
    %p131 = scmp.ne.s32.totalorder %s116, %s130
    %p132 = scmp.eq.s32.totalorder %s17, 0
    %p133 = por %p131, %p132
    %p134 = scmp.le.s32.totalorder 1, %s11
    %p135 = scmp.lt.s32.totalorder %s11, 4
    %p136 = pnand %p134, %p135
    %p137 = pneg %p136
    // Predicated region
    $region9: #{projection_head.2} parent=5 // pred_check
      _
    $region10: #{projection_head.2} parent=5 // pred_check_branch
      %139 = sbr.rel (%p136) target = $region12
    $region11: #{projection_head.2} parent=5 // pred_region
      %s140 = ssub.s32 %s11, 1
      // Predicated region
      $region13: #{projection_head.2} parent=11 // pred_check
        %p141 = pneg %p58
      $region14: #{projection_head.2} parent=11 // pred_check_branch
        %143 = sbr.rel (%p141) target = $region16
      $region15: #{projection_head.2} parent=11 // pred_region
        _
      $region16: #{projection_head.2} parent=11 // pred_fallthru
        _
    $region12: #{projection_head.2} parent=5 // pred_fallthru
      _
    %p144 = scmp.lt.s32.totalorder %s11, 3
    // Predicated region
    $region17: #{projection_head.2} parent=5 // pred_check
      %p145 = pneg %p144
    $region18: #{projection_head.2} parent=5 // pred_check_branch
      %147 = sbr.rel (%p145) target = $region20
    $region19: #{projection_head.2} parent=5 // pred_region
      // Predicated region
      $region21: #{projection_head.2} parent=19 // pred_check
        %p148 = pneg %p31
      $region22: #{projection_head.2} parent=19 // pred_check_branch
        %150 = sbr.rel (%p148) target = $region24
      $region23: #{projection_head.2} parent=19 // pred_region
        %p151 = scmp.lt.s32.totalorder %s11, 2
        %s152 = scalar_select %p151, %s11, 2
        %s153 = smul.addr %s152, 8
        %s154 = scalar_lea.vmem %s0, %s153
      $region24: #{projection_head.2} parent=19 // pred_fallthru
        _
    $region20: #{projection_head.2} parent=5 // pred_fallthru
      _
    %p155 = scmp.le.s32.totalorder 1, %s11
    %p156 = scmp.lt.s32.totalorder %s11, 4
    %p157 = pnand %p155, %p156
    %p158 = pneg %p157
    // Predicated region
    $region25: #{projection_head.2} parent=5 // pred_check
      _
    $region26: #{projection_head.2} parent=5 // pred_check_branch
      %160 = sbr.rel (%p157) target = $region28
    $region27: #{projection_head.2} parent=5 // pred_region
      %s161 = ssub.s32 %s11, 1
      %p162 = scmp.lt.s32.totalorder %s16, 2
      %s163 = scalar_select %p162, %s16, 2
      %s164 = smul.addr %s163, 8
      %s165 = scalar_lea.vmem %s0, %s164
      %p166 = pneg %p37
      %p167 = pneg %p34
      %p168 = pneg %p58
      %p169 = pneg %p55
      %p170 = pneg %p84
      %p171 = pneg %p81
      %p172 = scmp.lt.s32.totalorder %s16, 2
      %s173 = scalar_select %p172, %s16, 2
      %s174 = smul.addr %s173, 8
      %s175 = scalar_lea.vmem %s2, %s174
      %p176 = pneg %p105
      %p177 = pneg %p102
      %p178 = pneg %p126
      %p179 = pneg %p123
      %p180 = scmp.lt.s32.totalorder %s16, 2
      %s181 = scalar_select %p180, %s16, 2
      %s182 = smul.addr %s181, 8
      %s183 = scalar_lea.vmem %s0, %s182
      %p184 = scmp.lt.s32.totalorder %s16, 2
      %s185 = scalar_select %p184, %s16, 2
      %s186 = smul.addr %s185, 8
      %s187 = scalar_lea.vmem %s2, %s186
      %v188 = vld [vmem:[%s183] sm:$0xff]
      %v189 = vld [vmem:[%s1] sm:$0xff]
      %v190 = vld [vmem:[%s1 + $0x8] sm:$0xff]
      %v191 = vld [vmem:[%s1 + $0x10] sm:$0xff]
      %v192 = vld [vmem:[%s1 + $0x18] sm:$0xff]
      %v193 = vld [vmem:[%s1 + $0x20] sm:$0xff]
      %v194 = vld [vmem:[%s1 + $0x28] sm:$0xff]
      %v195 = vld [vmem:[%s1 + $0x30] sm:$0xff]
      %v196 = vld [vmem:[%s1 + $0x38] sm:$0xff]
      %v197 = vld [vmem:[%s1 + $0x40] sm:$0xff]
      %v198 = vld [vmem:[%s1 + $0x48] sm:$0xff]
      %v199 = vld [vmem:[%s1 + $0x50] sm:$0xff]
      %v200 = vld [vmem:[%s1 + $0x58] sm:$0xff]
      %v201 = vld [vmem:[%s1 + $0x60] sm:$0xff]
      %v202 = vld [vmem:[%s1 + $0x68] sm:$0xff]
      %v203 = vld [vmem:[%s1 + $0x70] sm:$0xff]
      %v204 = vld [vmem:[%s1 + $0x78] sm:$0xff]
      %205 = vmatprep.subr.mxu0 0.0
      %206 = vmatpush1.msra.mxu0 %v204
      %207 = vmatprep.subr.mxu0 0.0
      %208 = vmatpush1.msra.mxu0 %v203
      %209 = vmatprep.subr.mxu0 0.0
      %210 = vmatpush1.msra.mxu0 %v202
      %211 = vmatprep.subr.mxu0 0.0
      %212 = vmatpush1.msra.mxu0 %v201
      %213 = vmatprep.subr.mxu0 0.0
      %214 = vmatpush1.msra.mxu0 %v200
      %215 = vmatprep.subr.mxu0 0.0
      %216 = vmatpush1.msra.mxu0 %v199
      %217 = vmatprep.subr.mxu0 0.0
      %218 = vmatpush1.msra.mxu0 %v198
      %219 = vmatprep.subr.mxu0 0.0
      %220 = vmatpush1.msra.mxu0 %v197
      %221 = vmatprep.subr.mxu0 0.0
      %222 = vmatpush1.msra.mxu0 %v196
      %223 = vmatprep.subr.mxu0 0.0
      %224 = vmatpush1.msra.mxu0 %v195
      %225 = vmatprep.subr.mxu0 0.0
      %226 = vmatpush1.msra.mxu0 %v194
      %227 = vmatprep.subr.mxu0 0.0
      %228 = vmatpush1.msra.mxu0 %v193
      %229 = vmatprep.subr.mxu0 0.0
      %230 = vmatpush1.msra.mxu0 %v192
      %231 = vmatprep.subr.mxu0 0.0
      %232 = vmatpush1.msra.mxu0 %v191
      %233 = vmatprep.subr.mxu0 0.0
      %234 = vmatpush1.msra.mxu0 %v190
      %235 = vmatprep.subr.mxu0 0.0
      %236 = vmatpush1.msra.mxu0 %v189
      %237 = vmatprep.subr.mxu0 0.0
      %238 = vmatpush2.msra.mxu0 0.0
      %239 = vmatprep.subr.mxu0 0.0
      %240 = vmatpush2.msra.mxu0 0.0
      %241 = vmatprep.subr.mxu0 0.0
      %242 = vmatpush2.msra.mxu0 0.0
      %243 = vmatprep.subr.mxu0 0.0
      %244 = vmatpush2.msra.mxu0 0.0
      %245 = vmatprep.subr.mxu0 0.0
      %246 = vmatpush2.msra.mxu0 0.0
      %247 = vmatprep.subr.mxu0 0.0
      %248 = vmatpush2.msra.mxu0 0.0
      %249 = vmatprep.subr.mxu0 0.0
      %250 = vmatpush2.msra.mxu0 0.0
      %251 = vmatprep.subr.mxu0 0.0
      %252 = vmatpush2.msra.mxu0 0.0
      %253 = vmatprep.subr.mxu0 0.0
      %254 = vmatpush2.msra.mxu0 0.0
      %255 = vmatprep.subr.mxu0 0.0
      %256 = vmatpush2.msra.mxu0 0.0
      %257 = vmatprep.subr.mxu0 0.0
      %258 = vmatpush2.msra.mxu0 0.0
      %259 = vmatprep.subr.mxu0 0.0
      %260 = vmatpush2.msra.mxu0 0.0
      %261 = vmatprep.subr.mxu0 0.0
      %262 = vmatpush2.msra.mxu0 0.0
      %263 = vmatprep.subr.mxu0 0.0
      %264 = vmatpush2.msra.mxu0 0.0
      %265 = vmatprep.subr.mxu0 0.0
      %266 = vmatpush2.msra.mxu0 0.0
      %267 = vmatprep.subr.mxu0 0.0
      %268 = vmatpush2.msra.mxu0 0.0
      %269 = vmatprep.mubr.f32.mxu0 0.0
      %270 = vmatmul.mubr.f32.gmra.mxu0 %v188
      %v271 = vpop.f32.mrf.mxu0
      %v272 = vadd.f32 0.0, %v271
      %v273 = vpop.f32.mrf.mxu0
      %274 = vdwg.mxu0
      %275 = vst [vmem:[%s187] sm:$0xff] %v272
      %p276 = scmp.eq.s32.totalorder %s16, 0
      // Predicated region
      $region29: #{projection_head.2} parent=27 // pred_check
        %p277 = pneg %p276
      $region30: #{projection_head.2} parent=27 // pred_check_branch
        %279 = sbr.rel (%p277) target = $region32
      $region31: #{projection_head.2} parent=27 // pred_region
        %280 = vst [vmem:[%s3] sm:$0x1] 0.0
        %281 = vst [vmem:[%s4] sm:$0x1] 0.0
      $region32: #{projection_head.2} parent=27 // pred_fallthru
        _
      %v282 = vld [vmem:[%s3] sm:$0x1]
      %v283 = vrot.slane %v272, 4
      %v284 = vadd.f32 %v272, %v283
      %v285 = vrot.slane %v284, 2
      %v286 = vadd.f32 %v284, %v285
      %v287 = vrot.slane %v286, 1
      %v288 = vadd.f32 %v286, %v287
      %v289 = vadd.f32 %v282, %v288
      %290 = vst [vmem:[%s3] sm:$0x1] %v289
      %v291 = vld [vmem:[%s4] sm:$0x1]
      %v292 = vmul.f32 %v272, %v272
      %v293 = vrot.slane %v292, 4
      %v294 = vadd.f32 %v292, %v293
      %v295 = vrot.slane %v294, 2
      %v296 = vadd.f32 %v294, %v295
      %v297 = vrot.slane %v296, 1
      %v298 = vadd.f32 %v296, %v297
      %v299 = vadd.f32 %v291, %v298
      %300 = vst [vmem:[%s4] sm:$0x1] %v299
      %p301 = scmp.lt.s32.totalorder %s16, 2
      %s302 = scalar_select %p301, %s16, 2
      %s303 = smul.addr %s302, 8
      %s304 = scalar_lea.vmem %s2, %s303
      // Predicated region
      $region33: #{projection_head.2} parent=27 // pred_check
        %p305 = pneg %p81
      $region34: #{projection_head.2} parent=27 // pred_check_branch
        %307 = sbr.rel (%p305) target = $region36
      $region35: #{projection_head.2} parent=27 // pred_region
        _
      $region36: #{projection_head.2} parent=27 // pred_fallthru
        _
      // Predicated region
      $region37: #{projection_head.2} parent=27 // pred_check
        %p308 = pneg %p102
      $region38: #{projection_head.2} parent=27 // pred_check_branch
        %310 = sbr.rel (%p308) target = $region40
      $region39: #{projection_head.2} parent=27 // pred_region
        _
      $region40: #{projection_head.2} parent=27 // pred_fallthru
        _
      // Predicated region
      $region41: #{projection_head.2} parent=27 // pred_check
        %p311 = pneg %p123
      $region42: #{projection_head.2} parent=27 // pred_check_branch
        %313 = sbr.rel (%p311) target = $region44
      $region43: #{projection_head.2} parent=27 // pred_region
        _
      $region44: #{projection_head.2} parent=27 // pred_fallthru
        _
      // Predicated region
      $region45: #{projection_head.2} parent=27 // pred_check
        %p314 = pneg %p102
      $region46: #{projection_head.2} parent=27 // pred_check_branch
        %316 = sbr.rel (%p314) target = $region48
      $region47: #{projection_head.2} parent=27 // pred_region
        _
      $region48: #{projection_head.2} parent=27 // pred_fallthru
        _
      // Predicated region
      $region49: #{projection_head.2} parent=27 // pred_check
        %p317 = pneg %p123
      $region50: #{projection_head.2} parent=27 // pred_check_branch
        %319 = sbr.rel (%p317) target = $region52
      $region51: #{projection_head.2} parent=27 // pred_region
        _
      $region52: #{projection_head.2} parent=27 // pred_fallthru
        _
    $region28: #{projection_head.2} parent=5 // pred_fallthru
      _
    %p320 = scmp.le.s32.totalorder 2, %s11
    // Predicated region
    $region53: #{projection_head.2} parent=5 // pred_check
      %p321 = pneg %p320
    $region54: #{projection_head.2} parent=5 // pred_check_branch
      %323 = sbr.rel (%p321) target = $region56
    $region55: #{projection_head.2} parent=5 // pred_region
      %s324 = ssub.s32 %s11, 2
      // Predicated region
      $region57: #{projection_head.2} parent=55 // pred_check
        %p325 = pneg %p87
      $region58: #{projection_head.2} parent=55 // pred_check_branch
        %327 = sbr.rel (%p325) target = $region60
      $region59: #{projection_head.2} parent=55 // pred_region
        %p328 = scmp.lt.s32.totalorder %s17, 2
        %s329 = scalar_select %p328, %s17, 2
        %s330 = smul.addr %s329, 8
        %s331 = scalar_lea.vmem %s2, %s330
      $region60: #{projection_head.2} parent=55 // pred_fallthru
        _
    $region56: #{projection_head.2} parent=5 // pred_fallthru
      _
  $region6: #{projection_head.2} parent=0 // loop_footer
    %s15 = sadd.s32 1, %s11
  $region7: #{projection_head.2} parent=0 // loop_footer_branch
    %10 = sbr.rel target = $region3
  $region8: #{projection_head.2} parent=0 // loop_exit
    _

// kernel: projection_head.3
$region0: #{projection_head.3}
  #allocation0 [shape = 'u32[]', space=smem, size = 0x4, offset = 0x4, fixed_abs, tag = 'smem constant byte address 0x4 - core index']
  #allocation1 [shape = 'u32[144,128]{1,0:T(1,128)}', space=vmem, size = 0x12000, scoped, tag = 'internal scratch']
  %s0 = inlined_call_operand.vmem [shape: f32[24,128], index: 0, kind: input, shape index: {}]
  %s1 = inlined_call_operand.vmem [shape: f32[1,128], index: 1, kind: input, shape index: {}]
  %s2 = inlined_call_operand.vmem [shape: f32[1,128], index: 2, kind: input, shape index: {}]
  %s3 = inlined_call_operand.vmem [shape: f32[1,128], index: 3, kind: input, shape index: {}]
  %s4 = inlined_call_operand.vmem [shape: f32[1,128], index: 4, kind: input, shape index: {}]
  %s5 = inlined_call_operand.vmem [shape: f32[128,128], index: 5, kind: input, shape index: {}]
  %s6 = inlined_call_operand.vmem [shape: f32[1,128], index: 6, kind: input, shape index: {}]
  %s7 = inlined_call_operand.vmem [shape: f32[24,128], index: 7, kind: output, shape index: {}]
  %s8 = sld [smem:[#allocation0]]
  $region61: #{projection_head.3} parent=0
    _
  %s10 = ssub.s32 1, %s8
  %s11 = scalar_select 0, %s10, %s8
  loop: start=0, step=1, limit=5
  $region2: #{projection_head.3} parent=0 // loop_pre_header
    _
  $region3: #{projection_head.3} parent=0 // loop_header
    %s13 = sphi 0, %s17
    %p14 = scmp.ge.s32.totalorder %s13, 5
    %s23 = sphi 0, %s25
    %s26 = sphi 0, %s23
    %s27 = sphi 0, %s26
    %s43 = sphi 0, %s27
    %s47 = sphi 0, %s47
    %s49 = sphi 0, %s47
    %s50 = sphi 0, %s49
    %s64 = sphi 0, %s50
    %s68 = sphi 0, %s68
    %s70 = sphi 0, %s68
    %s71 = sphi 0, %s70
    %s85 = sphi 0, %s71
    %s89 = sphi 0, %s89
    %s91 = sphi 0, %s89
    %s92 = sphi 0, %s91
    %s106 = sphi 0, %s92
    %s110 = sphi 0, %s110
    %s112 = sphi 0, %s110
    %s113 = sphi 0, %s112
    %s127 = sphi 0, %s113
    %s131 = sphi 0, %s131
    %s133 = sphi 0, %s131
    %s134 = sphi 0, %s133
    %s148 = sphi 0, %s134
    %s152 = sphi 0, %s152
    %s154 = sphi 0, %s152
    %s155 = sphi 0, %s154
    %s169 = sphi 0, %s155
    %s175 = sphi 0, %s177
    %s178 = sphi 0, %s175
    %s179 = sphi 0, %s178
    %s195 = sphi 0, %s179
  $region4: #{projection_head.3} parent=0 // loop_header_branch
    %16 = sbr.rel (%p14) target = $region8
  $region5: #{projection_head.3} parent=0 // loop_body
    %s18 = ssub.s32 %s13, 1
    %s19 = ssub.s32 %s13, 2
    %s20 = sadd.s32 %s13, 1
    %s21 = ssub.s32 %s13, %s20
    %p22 = scmp.eq.s32.totalorder %s21, 0
    %s24 = sadd.s32 %s23, 1
    %s25 = scalar_select %p22, %s23, %s24
    %p28 = pneg %p22
    %p29 = scmp.eq.s32.totalorder %s13, 2
    %p30 = por %p28, %p29
    %p31 = scmp.ne.s32.totalorder %s23, %s26
    %p32 = scmp.eq.s32.totalorder %s13, 0
    %p33 = por %p31, %p32
    %p34 = scmp.ne.s32.totalorder %s23, %s26
    %p35 = scmp.eq.s32.totalorder %s18, 2
    %p36 = por %p34, %p35
    %p37 = scmp.ne.s32.totalorder %s26, %s27
    %p38 = scmp.eq.s32.totalorder %s18, 0
    %p39 = por %p37, %p38
    %p40 = scmp.ne.s32.totalorder %s26, %s27
    %p41 = scmp.eq.s32.totalorder %s19, 2
    %p42 = por %p40, %p41
    %p44 = scmp.ne.s32.totalorder %s27, %s43
    %p45 = scmp.eq.s32.totalorder %s19, 0
    %p46 = por %p44, %p45
    %s48 = sadd.s32 %s47, 1
    %p51 = scmp.eq.s32.totalorder %s13, 2
    %p52 = scmp.ne.s32.totalorder %s47, %s49
    %p53 = scmp.eq.s32.totalorder %s13, 0
    %p54 = por %p52, %p53
    %p55 = scmp.ne.s32.totalorder %s47, %s49
    %p56 = scmp.eq.s32.totalorder %s18, 2
    %p57 = por %p55, %p56
    %p58 = scmp.ne.s32.totalorder %s49, %s50
    %p59 = scmp.eq.s32.totalorder %s18, 0
    %p60 = por %p58, %p59
    %p61 = scmp.ne.s32.totalorder %s49, %s50
    %p62 = scmp.eq.s32.totalorder %s19, 2
    %p63 = por %p61, %p62
    %p65 = scmp.ne.s32.totalorder %s50, %s64
    %p66 = scmp.eq.s32.totalorder %s19, 0
    %p67 = por %p65, %p66
    %s69 = sadd.s32 %s68, 1
    %p72 = scmp.eq.s32.totalorder %s13, 2
    %p73 = scmp.ne.s32.totalorder %s68, %s70
    %p74 = scmp.eq.s32.totalorder %s13, 0
    %p75 = por %p73, %p74
    %p76 = scmp.ne.s32.totalorder %s68, %s70
    %p77 = scmp.eq.s32.totalorder %s18, 2
    %p78 = por %p76, %p77
    %p79 = scmp.ne.s32.totalorder %s70, %s71
    %p80 = scmp.eq.s32.totalorder %s18, 0
    %p81 = por %p79, %p80
    %p82 = scmp.ne.s32.totalorder %s70, %s71
    %p83 = scmp.eq.s32.totalorder %s19, 2
    %p84 = por %p82, %p83
    %p86 = scmp.ne.s32.totalorder %s71, %s85
    %p87 = scmp.eq.s32.totalorder %s19, 0
    %p88 = por %p86, %p87
    %s90 = sadd.s32 %s89, 1
    %p93 = scmp.eq.s32.totalorder %s13, 2
    %p94 = scmp.ne.s32.totalorder %s89, %s91
    %p95 = scmp.eq.s32.totalorder %s13, 0
    %p96 = por %p94, %p95
    %p97 = scmp.ne.s32.totalorder %s89, %s91
    %p98 = scmp.eq.s32.totalorder %s18, 2
    %p99 = por %p97, %p98
    %p100 = scmp.ne.s32.totalorder %s91, %s92
    %p101 = scmp.eq.s32.totalorder %s18, 0
    %p102 = por %p100, %p101
    %p103 = scmp.ne.s32.totalorder %s91, %s92
    %p104 = scmp.eq.s32.totalorder %s19, 2
    %p105 = por %p103, %p104
    %p107 = scmp.ne.s32.totalorder %s92, %s106
    %p108 = scmp.eq.s32.totalorder %s19, 0
    %p109 = por %p107, %p108
    %s111 = sadd.s32 %s110, 1
    %p114 = scmp.eq.s32.totalorder %s13, 2
    %p115 = scmp.ne.s32.totalorder %s110, %s112
    %p116 = scmp.eq.s32.totalorder %s13, 0
    %p117 = por %p115, %p116
    %p118 = scmp.ne.s32.totalorder %s110, %s112
    %p119 = scmp.eq.s32.totalorder %s18, 2
    %p120 = por %p118, %p119
    %p121 = scmp.ne.s32.totalorder %s112, %s113
    %p122 = scmp.eq.s32.totalorder %s18, 0
    %p123 = por %p121, %p122
    %p124 = scmp.ne.s32.totalorder %s112, %s113
    %p125 = scmp.eq.s32.totalorder %s19, 2
    %p126 = por %p124, %p125
    %p128 = scmp.ne.s32.totalorder %s113, %s127
    %p129 = scmp.eq.s32.totalorder %s19, 0
    %p130 = por %p128, %p129
    %s132 = sadd.s32 %s131, 1
    %p135 = scmp.eq.s32.totalorder %s13, 2
    %p136 = scmp.ne.s32.totalorder %s131, %s133
    %p137 = scmp.eq.s32.totalorder %s13, 0
    %p138 = por %p136, %p137
    %p139 = scmp.ne.s32.totalorder %s131, %s133
    %p140 = scmp.eq.s32.totalorder %s18, 2
    %p141 = por %p139, %p140
    %p142 = scmp.ne.s32.totalorder %s133, %s134
    %p143 = scmp.eq.s32.totalorder %s18, 0
    %p144 = por %p142, %p143
    %p145 = scmp.ne.s32.totalorder %s133, %s134
    %p146 = scmp.eq.s32.totalorder %s19, 2
    %p147 = por %p145, %p146
    %p149 = scmp.ne.s32.totalorder %s134, %s148
    %p150 = scmp.eq.s32.totalorder %s19, 0
    %p151 = por %p149, %p150
    %s153 = sadd.s32 %s152, 1
    %p156 = scmp.eq.s32.totalorder %s13, 2
    %p157 = scmp.ne.s32.totalorder %s152, %s154
    %p158 = scmp.eq.s32.totalorder %s13, 0
    %p159 = por %p157, %p158
    %p160 = scmp.ne.s32.totalorder %s152, %s154
    %p161 = scmp.eq.s32.totalorder %s18, 2
    %p162 = por %p160, %p161
    %p163 = scmp.ne.s32.totalorder %s154, %s155
    %p164 = scmp.eq.s32.totalorder %s18, 0
    %p165 = por %p163, %p164
    %p166 = scmp.ne.s32.totalorder %s154, %s155
    %p167 = scmp.eq.s32.totalorder %s19, 2
    %p168 = por %p166, %p167
    %p170 = scmp.ne.s32.totalorder %s155, %s169
    %p171 = scmp.eq.s32.totalorder %s19, 0
    %p172 = por %p170, %p171
    %s173 = ssub.s32 %s13, %s20
    %p174 = scmp.eq.s32.totalorder %s173, 0
    %s176 = sadd.s32 %s175, 1
    %s177 = scalar_select %p174, %s175, %s176
    %p180 = pneg %p174
    %p181 = scmp.eq.s32.totalorder %s13, 2
    %p182 = por %p180, %p181
    %p183 = scmp.ne.s32.totalorder %s175, %s178
    %p184 = scmp.eq.s32.totalorder %s13, 0
    %p185 = por %p183, %p184
    %p186 = scmp.ne.s32.totalorder %s175, %s178
    %p187 = scmp.eq.s32.totalorder %s18, 2
    %p188 = por %p186, %p187
    %p189 = scmp.ne.s32.totalorder %s178, %s179
    %p190 = scmp.eq.s32.totalorder %s18, 0
    %p191 = por %p189, %p190
    %p192 = scmp.ne.s32.totalorder %s178, %s179
    %p193 = scmp.eq.s32.totalorder %s19, 2
    %p194 = por %p192, %p193
    %p196 = scmp.ne.s32.totalorder %s179, %s195
    %p197 = scmp.eq.s32.totalorder %s19, 0
    %p198 = por %p196, %p197
    %p199 = scmp.le.s32.totalorder 1, %s13
    %p200 = scmp.lt.s32.totalorder %s13, 4
    %p201 = pnand %p199, %p200
    %p202 = pneg %p201
    // Predicated region
    $region9: #{projection_head.3} parent=5 // pred_check
      _
    $region10: #{projection_head.3} parent=5 // pred_check_branch
      %204 = sbr.rel (%p201) target = $region12
    $region11: #{projection_head.3} parent=5 // pred_region
      %s205 = ssub.s32 %s13, 1
      // Predicated region
      $region13: #{projection_head.3} parent=11 // pred_check
        %p206 = pneg %p60
      $region14: #{projection_head.3} parent=11 // pred_check_branch
        %208 = sbr.rel (%p206) target = $region16
      $region15: #{projection_head.3} parent=11 // pred_region
        _
      $region16: #{projection_head.3} parent=11 // pred_fallthru
        _
      // Predicated region
      $region17: #{projection_head.3} parent=11 // pred_check
        %p209 = pneg %p81
      $region18: #{projection_head.3} parent=11 // pred_check_branch
        %211 = sbr.rel (%p209) target = $region20
      $region19: #{projection_head.3} parent=11 // pred_region
        _
      $region20: #{projection_head.3} parent=11 // pred_fallthru
        _
      // Predicated region
      $region21: #{projection_head.3} parent=11 // pred_check
        %p212 = pneg %p102
      $region22: #{projection_head.3} parent=11 // pred_check_branch
        %214 = sbr.rel (%p212) target = $region24
      $region23: #{projection_head.3} parent=11 // pred_region
        _
      $region24: #{projection_head.3} parent=11 // pred_fallthru
        _
      // Predicated region
      $region25: #{projection_head.3} parent=11 // pred_check
        %p215 = pneg %p123
      $region26: #{projection_head.3} parent=11 // pred_check_branch
        %217 = sbr.rel (%p215) target = $region28
      $region27: #{projection_head.3} parent=11 // pred_region
        _
      $region28: #{projection_head.3} parent=11 // pred_fallthru
        _
      // Predicated region
      $region29: #{projection_head.3} parent=11 // pred_check
        %p218 = pneg %p144
      $region30: #{projection_head.3} parent=11 // pred_check_branch
        %220 = sbr.rel (%p218) target = $region32
      $region31: #{projection_head.3} parent=11 // pred_region
        _
      $region32: #{projection_head.3} parent=11 // pred_fallthru
        _
      // Predicated region
      $region33: #{projection_head.3} parent=11 // pred_check
        %p221 = pneg %p165
      $region34: #{projection_head.3} parent=11 // pred_check_branch
        %223 = sbr.rel (%p221) target = $region36
      $region35: #{projection_head.3} parent=11 // pred_region
        _
      $region36: #{projection_head.3} parent=11 // pred_fallthru
        _
    $region12: #{projection_head.3} parent=5 // pred_fallthru
      _
    %p224 = scmp.lt.s32.totalorder %s13, 3
    // Predicated region
    $region37: #{projection_head.3} parent=5 // pred_check
      %p225 = pneg %p224
    $region38: #{projection_head.3} parent=5 // pred_check_branch
      %227 = sbr.rel (%p225) target = $region40
    $region39: #{projection_head.3} parent=5 // pred_region
      // Predicated region
      $region41: #{projection_head.3} parent=39 // pred_check
        %p228 = pneg %p33
      $region42: #{projection_head.3} parent=39 // pred_check_branch
        %230 = sbr.rel (%p228) target = $region44
      $region43: #{projection_head.3} parent=39 // pred_region
        %p231 = scmp.lt.s32.totalorder %s13, 2
        %s232 = scalar_select %p231, %s13, 2
        %s233 = smul.addr %s232, 8
        %s234 = scalar_lea.vmem %s0, %s233
      $region44: #{projection_head.3} parent=39 // pred_fallthru
        _
    $region40: #{projection_head.3} parent=5 // pred_fallthru
      _
    %p235 = scmp.le.s32.totalorder 1, %s13
    %p236 = scmp.lt.s32.totalorder %s13, 4
    %p237 = pnand %p235, %p236
    %p238 = pneg %p237
    // Predicated region
    $region45: #{projection_head.3} parent=5 // pred_check
      _
    $region46: #{projection_head.3} parent=5 // pred_check_branch
      %240 = sbr.rel (%p237) target = $region48
    $region47: #{projection_head.3} parent=5 // pred_region
      %s241 = ssub.s32 %s13, 1
      %p242 = scmp.lt.s32.totalorder %s18, 2
      %s243 = scalar_select %p242, %s18, 2
      %s244 = smul.addr %s243, 8
      %s245 = scalar_lea.vmem %s0, %s244
      %p246 = pneg %p39
      %p247 = pneg %p36
      %p248 = pneg %p60
      %p249 = pneg %p57
      %p250 = pneg %p81
      %p251 = pneg %p78
      %p252 = pneg %p102
      %p253 = pneg %p99
      %p254 = pneg %p123
      %p255 = pneg %p120
      %p256 = pneg %p144
      %p257 = pneg %p141
      %p258 = pneg %p165
      %p259 = pneg %p162
      %p260 = pneg %p191
      %p261 = pneg %p188
      %p262 = scmp.lt.s32.totalorder %s18, 2
      %s263 = scalar_select %p262, %s18, 2
      %s264 = smul.addr %s263, 8
      %s265 = scalar_lea.vmem %s7, %s264
      %p266 = scmp.lt.s32.totalorder %s18, 2
      %s267 = scalar_select %p266, %s18, 2
      %s268 = smul.addr %s267, 8
      %s269 = scalar_lea.vmem %s0, %s268
      %p270 = scmp.lt.s32.totalorder %s18, 2
      %s271 = scalar_select %p270, %s18, 2
      %s272 = smul.addr %s271, 8
      %s273 = scalar_lea.vmem %s7, %s272
      %v274 = vld [vmem:[%s1] sm:$0x1]
      %v275 = vmul.f32 %v274, 0.05
      %v276 = vld [vmem:[%s2] sm:$0x1]
      %v277 = vmul.f32 %v276, 0.05
      %v278 = vmul.f32 %v275, %v275
      %v279 = vsub.f32 %v277, %v278
      %v280 = vmax.f32 %v279, 0.0
      %v281 = vadd.f32 %v280, 1e-05
      %v282 = vrsqrt.pop %v281
      %v283 = vld [vmem:[%s3] sm:$0x1]
      %v284 = vmul.f32 %v283, %v282
      %v285 = vld [vmem:[%s4] sm:$0x1]
      %v286 = vmul.f32 %v275, %v284
      %v287 = vsub.f32 %v285, %v286
      %v288 = vld [vmem:[%s269] sm:$0xff]
      %v290 = vlaneseq
      %v291 = vshrl.u32 %v290, 7
      %v292 = vsub.s32 0, %v291
      %v293 = vrot.slane %v284, %v292
      %v295 = vmul.f32 %v288, %v293
      %v297 = vlaneseq
      %v298 = vshrl.u32 %v297, 7
      %v299 = vsub.s32 0, %v298
      %v300 = vrot.slane %v287, %v299
      %v302 = vadd.f32 %v295, %v300
      %v303 = vmax.f32 %v302, 0.0
      %v304 = vld [vmem:[%s5] sm:$0xff]
      %v305 = vld [vmem:[%s5 + $0x8] sm:$0xff]
      %v306 = vld [vmem:[%s5 + $0x10] sm:$0xff]
      %v307 = vld [vmem:[%s5 + $0x18] sm:$0xff]
      %v308 = vld [vmem:[%s5 + $0x20] sm:$0xff]
      %v309 = vld [vmem:[%s5 + $0x28] sm:$0xff]
      %v310 = vld [vmem:[%s5 + $0x30] sm:$0xff]
      %v311 = vld [vmem:[%s5 + $0x38] sm:$0xff]
      %v312 = vld [vmem:[%s5 + $0x40] sm:$0xff]
      %v313 = vld [vmem:[%s5 + $0x48] sm:$0xff]
      %v314 = vld [vmem:[%s5 + $0x50] sm:$0xff]
      %v315 = vld [vmem:[%s5 + $0x58] sm:$0xff]
      %v316 = vld [vmem:[%s5 + $0x60] sm:$0xff]
      %v317 = vld [vmem:[%s5 + $0x68] sm:$0xff]
      %v318 = vld [vmem:[%s5 + $0x70] sm:$0xff]
      %v319 = vld [vmem:[%s5 + $0x78] sm:$0xff]
      %v320 = vld [vmem:[%s6] sm:$0x1]
      %v322 = vlaneseq
      %v323 = vshrl.u32 %v322, 7
      %v324 = vsub.s32 0, %v323
      %v325 = vrot.slane %v320, %v324
      %327 = vmatprep.subr.mxu0 0.0
      %328 = vmatpush1.msra.mxu0 %v319
      %329 = vmatprep.subr.mxu0 0.0
      %330 = vmatpush1.msra.mxu0 %v318
      %331 = vmatprep.subr.mxu0 0.0
      %332 = vmatpush1.msra.mxu0 %v317
      %333 = vmatprep.subr.mxu0 0.0
      %334 = vmatpush1.msra.mxu0 %v316
      %335 = vmatprep.subr.mxu0 0.0
      %336 = vmatpush1.msra.mxu0 %v315
      %337 = vmatprep.subr.mxu0 0.0
      %338 = vmatpush1.msra.mxu0 %v314
      %339 = vmatprep.subr.mxu0 0.0
      %340 = vmatpush1.msra.mxu0 %v313
      %341 = vmatprep.subr.mxu0 0.0
      %342 = vmatpush1.msra.mxu0 %v312
      %343 = vmatprep.subr.mxu0 0.0
      %344 = vmatpush1.msra.mxu0 %v311
      %345 = vmatprep.subr.mxu0 0.0
      %346 = vmatpush1.msra.mxu0 %v310
      %347 = vmatprep.subr.mxu0 0.0
      %348 = vmatpush1.msra.mxu0 %v309
      %349 = vmatprep.subr.mxu0 0.0
      %350 = vmatpush1.msra.mxu0 %v308
      %351 = vmatprep.subr.mxu0 0.0
      %352 = vmatpush1.msra.mxu0 %v307
      %353 = vmatprep.subr.mxu0 0.0
      %354 = vmatpush1.msra.mxu0 %v306
      %355 = vmatprep.subr.mxu0 0.0
      %356 = vmatpush1.msra.mxu0 %v305
      %357 = vmatprep.subr.mxu0 0.0
      %358 = vmatpush1.msra.mxu0 %v304
      %359 = vmatprep.subr.mxu0 0.0
      %360 = vmatpush2.msra.mxu0 0.0
      %361 = vmatprep.subr.mxu0 0.0
      %362 = vmatpush2.msra.mxu0 0.0
      %363 = vmatprep.subr.mxu0 0.0
      %364 = vmatpush2.msra.mxu0 0.0
      %365 = vmatprep.subr.mxu0 0.0
      %366 = vmatpush2.msra.mxu0 0.0
      %367 = vmatprep.subr.mxu0 0.0
      %368 = vmatpush2.msra.mxu0 0.0
      %369 = vmatprep.subr.mxu0 0.0
      %370 = vmatpush2.msra.mxu0 0.0
      %371 = vmatprep.subr.mxu0 0.0
      %372 = vmatpush2.msra.mxu0 0.0
      %373 = vmatprep.subr.mxu0 0.0
      %374 = vmatpush2.msra.mxu0 0.0
      %375 = vmatprep.subr.mxu0 0.0
      %376 = vmatpush2.msra.mxu0 0.0
      %377 = vmatprep.subr.mxu0 0.0
      %378 = vmatpush2.msra.mxu0 0.0
      %379 = vmatprep.subr.mxu0 0.0
      %380 = vmatpush2.msra.mxu0 0.0
      %381 = vmatprep.subr.mxu0 0.0
      %382 = vmatpush2.msra.mxu0 0.0
      %383 = vmatprep.subr.mxu0 0.0
      %384 = vmatpush2.msra.mxu0 0.0
      %385 = vmatprep.subr.mxu0 0.0
      %386 = vmatpush2.msra.mxu0 0.0
      %387 = vmatprep.subr.mxu0 0.0
      %388 = vmatpush2.msra.mxu0 0.0
      %389 = vmatprep.subr.mxu0 0.0
      %390 = vmatpush2.msra.mxu0 0.0
      %391 = vmatprep.mubr.f32.mxu0 0.0
      %392 = vmatmul.mubr.f32.gmra.mxu0 %v303
      %v393 = vpop.f32.mrf.mxu0
      %v394 = vadd.f32 %v325, %v393
      %v395 = vpop.f32.mrf.mxu0
      %396 = vdwg.mxu0
      %397 = vst [vmem:[%s273] sm:$0xff] %v394
      %p398 = scmp.lt.s32.totalorder %s18, 2
      %s399 = scalar_select %p398, %s18, 2
      %s400 = smul.addr %s399, 8
      %s401 = scalar_lea.vmem %s7, %s400
      // Predicated region
      $region49: #{projection_head.3} parent=47 // pred_check
        %p402 = pneg %p188
      $region50: #{projection_head.3} parent=47 // pred_check_branch
        %404 = sbr.rel (%p402) target = $region52
      $region51: #{projection_head.3} parent=47 // pred_region
        _
      $region52: #{projection_head.3} parent=47 // pred_fallthru
        _
    $region48: #{projection_head.3} parent=5 // pred_fallthru
      _
    %p405 = scmp.le.s32.totalorder 2, %s13
    // Predicated region
    $region53: #{projection_head.3} parent=5 // pred_check
      %p406 = pneg %p405
    $region54: #{projection_head.3} parent=5 // pred_check_branch
      %408 = sbr.rel (%p406) target = $region56
    $region55: #{projection_head.3} parent=5 // pred_region
      %s409 = ssub.s32 %s13, 2
      // Predicated region
      $region57: #{projection_head.3} parent=55 // pred_check
        %p410 = pneg %p194
      $region58: #{projection_head.3} parent=55 // pred_check_branch
        %412 = sbr.rel (%p410) target = $region60
      $region59: #{projection_head.3} parent=55 // pred_region
        %p413 = scmp.lt.s32.totalorder %s19, 2
        %s414 = scalar_select %p413, %s19, 2
        %s415 = smul.addr %s414, 8
        %s416 = scalar_lea.vmem %s7, %s415
      $region60: #{projection_head.3} parent=55 // pred_fallthru
        _
    $region56: #{projection_head.3} parent=5 // pred_fallthru
      _
  $region6: #{projection_head.3} parent=0 // loop_footer
    %s17 = sadd.s32 1, %s13
  $region7: #{projection_head.3} parent=0 // loop_footer_branch
    %12 = sbr.rel target = $region3
  $region8: #{projection_head.3} parent=0 // loop_exit
    _

</llo_original>
